<compile_context>
chip_gen: v7x
topology: tpu7x:2x2x1
jax: 0.10.0
libtpu: 0.0.40
codegen_flags: <defaults>
</compile_context>

<pallas_src>
import math
import functools

import jax
import jax.numpy as jnp
import numpy as np
from jax import lax
from jax.experimental import pallas as pl
from jax.experimental.pallas import tpu as pltpu

# ----------------------------- config (small, synthetic) --------------------
B = 2            # batch_size
N = 16           # nodes per session graph
D = 32           # embedding_size
L = 8            # number of positions used (node_pos_matrix last dim)
N_LAYER = 2      # n_layer
NUM_ITEM = 20
NUM_CLUSTER = 8  # num_image == num_text
NUM_NODE = NUM_ITEM + 2 * NUM_CLUSTER
NUM_TYPE = 4
POS_TABLE_SIZE = 150

DP = 128         # lane-dense padded feature width


# ----------------------------- Pallas kernel --------------------------------
def vlgraph_kernel(nodes_ref, type_ref, pos_ref, adj_ref,
                   t_node_ref, t_type_ref, t_pos_ref, w_gcn_ref, b_gcn_ref,
                   out_ref, *, n_layer):
    """One grid step == one batch element; everything lives in VMEM.

    nodes_ref : [1, N, 1]    int32 node ids
    type_ref  : [1, N, 1]    int32 node types
    pos_ref   : [1, N, Lp]   f32 node_pos_matrix (zero-padded cols)
    adj_ref   : [1, N, N]    f32 adjacency for this batch element
    t_node_ref: [NODEp, DP]  f32 embedding @ w_pos_type[:D]    (zero-padded)
    t_type_ref: [TYPEp, DP]  f32 type_emb  @ w_pos_type[D:2D]  (zero-padded)
    t_pos_ref : [Lp, DP]     f32 pos_emb[:L] @ w_pos_type[2D:] (zero-padded)
    w_gcn_ref : [DP, DP]     f32 GCN weight (zero-padded)
    b_gcn_ref : [1, DP]      f32 GCN bias   (zero-padded)
    out_ref   : [1, N, DP]   f32 (caller slices [:, :, :D])
    """
    n = adj_ref.shape[1]
    dp = out_ref.shape[-1]
    node_pad = t_node_ref.shape[0]
    type_pad = t_type_ref.shape[0]

    node_idx = nodes_ref[0]                      # [N, 1] int32
    type_idx = type_ref[0]                       # [N, 1] int32
    pos_mat = pos_ref[0]                         # [N, Lp] f32
    adj = adj_ref[0]                             # [N, N]  f32

    # Gathers as one-hot MXU matmuls (tables already carry w_pos_type).
    onehot_nodes = (lax.broadcasted_iota(jnp.int32, (n, node_pad), 1)
                    == node_idx).astype(jnp.float32)
    onehot_type = (lax.broadcasted_iota(jnp.int32, (n, type_pad), 1)
                   == type_idx).astype(jnp.float32)

    mask_col = (type_idx > 0).astype(jnp.float32)           # clamp(type, max=1)
    pos_scale = mask_col / (jnp.sum(pos_mat, axis=-1, keepdims=True) + 1e-9)

    h = (jnp.dot(onehot_nodes, t_node_ref[...], preferred_element_type=jnp.float32)
         + jnp.dot(onehot_type, t_type_ref[...], preferred_element_type=jnp.float32)
         + pos_scale * jnp.dot(pos_mat, t_pos_ref[...],
                               preferred_element_type=jnp.float32))

    # Hoist broadcasts out of the unrolled layer loop (JAX doesn't CSE them).
    w_gcn = w_gcn_ref[...]
    bias_b = jnp.broadcast_to(b_gcn_ref[...], (n, dp))
    mask_b = jnp.broadcast_to(mask_col, (n, dp))

    # TODO(synk): RGATLayer/HeteAttenLayer/KVAttentionLayer/SAGE/GAT are not
    # defined in the reference source; the 'gcn' aggregator is implemented as
    # relu((adj @ h) @ W + b). Dropout is identity (eval mode).
    for _ in range(n_layer):
        agg = jnp.dot(adj, h, preferred_element_type=jnp.float32)
        h = jnp.maximum(
            jnp.dot(agg, w_gcn, preferred_element_type=jnp.float32) + bias_b, 0.0)
        h = h * mask_b

    out_ref[...] = h[None, :, :]


# ----------------------------- wrapper ---------------------------------------
def _round_up(x, m):
    return ((x + m - 1) // m) * m


def _pad2(a, rows, cols):
    out = jnp.zeros((rows, cols), a.dtype)
    return out.at[: a.shape[0], : a.shape[1]].set(a)


@functools.partial(jax.jit, static_argnames=("n_layer",))
def vlgraph_forward(params, adj, nodes, node_type_mask, node_pos_matrix,
                    n_layer=N_LAYER):
    """adj: [B,N,N] f32, nodes: [B,N] i32, node_type_mask: [B,N] i32,
       node_pos_matrix: [B,N,L] f32  ->  [B,N,D] f32."""
    b, n = nodes.shape
    d = params["embedding"].shape[-1]
    l = node_pos_matrix.shape[-1]

    # Fold w_pos_type into the (tiny, <10 KB) lookup tables so each in-kernel
    # one-hot gather directly produces a lane-dense [N, DP] contribution:
    #   concat([e, t, p]) @ w_pt == e @ w_pt[:D] + t @ w_pt[D:2D] + p @ w_pt[2D:]
    # and the per-row pos normalization/mask commute with the right-matmul.
    w_pt = params["w_pos_type"]
    node_pad = _round_up(params["embedding"].shape[0], 8)
    type_pad = _round_up(params["node_type_embedding"].shape[0], 8)
    l_pad = _round_up(l, 8)

    t_node = _pad2(params["embedding"] @ w_pt[:d], node_pad, DP)
    t_type = _pad2(params["node_type_embedding"] @ w_pt[d:2 * d], type_pad, DP)
    t_pos = _pad2(params["pos_embedding"][:l] @ w_pt[2 * d:], l_pad, DP)
    w_gcn_p = _pad2(params["w_gcn"], DP, DP)
    b_gcn_p = _pad2(params["b_gcn"], 1, DP)

    nodes3 = nodes.astype(jnp.int32)[:, :, None]           # [B, N, 1]
    type3 = node_type_mask.astype(jnp.int32)[:, :, None]   # [B, N, 1]
    pos3 = node_pos_matrix.astype(jnp.float32)
    if l_pad != l:
        pos3 = jnp.pad(pos3, ((0, 0), (0, 0), (0, l_pad - l)))
    adjf = adj.astype(jnp.float32)
    # TODO(synk): at larger B*N store adj / tables / weights in bf16 (keep the
    # f32 accumulators) and tile N into row blocks instead of full [N,N] blocks.

    flops = b * (2 * n * node_pad * DP + 2 * n * type_pad * DP
                 + 2 * n * l_pad * DP
                 + n_layer * (2 * n * n * DP + 2 * n * DP * DP))
    bytes_accessed = 4 * (nodes3.size + type3.size + pos3.size + adjf.size
                          + t_node.size + t_type.size + t_pos.size
                          + w_gcn_p.size + b_gcn_p.size + b * n * DP)

    kernel = functools.partial(vlgraph_kernel, n_layer=n_layer)

    out = pl.pallas_call(
        kernel,
        out_shape=jax.ShapeDtypeStruct((b, n, DP), jnp.float32),
        grid=(b,),
        in_specs=[
            pl.BlockSpec((1, n, 1), lambda i: (i, 0, 0)),        # nodes
            pl.BlockSpec((1, n, 1), lambda i: (i, 0, 0)),        # node_type
            pl.BlockSpec((1, n, l_pad), lambda i: (i, 0, 0)),    # pos matrix
            pl.BlockSpec((1, n, n), lambda i: (i, 0, 0)),        # adjacency
            pl.BlockSpec((node_pad, DP), lambda i: (0, 0)),      # node table
            pl.BlockSpec((type_pad, DP), lambda i: (0, 0)),      # type table
            pl.BlockSpec((l_pad, DP), lambda i: (0, 0)),         # pos table
            pl.BlockSpec((DP, DP), lambda i: (0, 0)),            # w_gcn
            pl.BlockSpec((1, DP), lambda i: (0, 0)),             # b_gcn
        ],
        out_specs=pl.BlockSpec((1, n, DP), lambda i: (i, 0, 0)),
        compiler_params=pltpu.CompilerParams(
            dimension_semantics=("parallel",),
            vmem_limit_bytes=32 * 1024 * 1024,
        ),
        cost_estimate=pl.CostEstimate(
            flops=flops, transcendentals=0, bytes_accessed=bytes_accessed),
    )(nodes3, type3, pos3, adjf, t_node, t_type, t_pos, w_gcn_p, b_gcn_p)

    return out[:, :, :d]


# ----------------------------- pure-JAX reference ----------------------------
def vlgraph_ref(params, adj, nodes, node_type_mask, node_pos_matrix,
                n_layer=N_LAYER):
    h = params["embedding"][nodes]
    type_emb = params["node_type_embedding"][node_type_mask]
    mask = jnp.minimum(node_type_mask, 1).astype(jnp.float32)[..., None]
    pos_mat = node_pos_matrix.astype(jnp.float32)
    l = pos_mat.shape[-1]
    pos_emb = pos_mat @ params["pos_embedding"][:l]
    pos_emb = pos_emb / (jnp.sum(pos_mat, -1, keepdims=True) + 1e-9)
    pos_emb = pos_emb * mask
    h = jnp.concatenate([h, type_emb, pos_emb], -1) @ params["w_pos_type"]
    for _ in range(n_layer):
        h = jax.nn.relu((adj @ h) @ params["w_gcn"] + params["b_gcn"])
        h = h * mask
    return h


# ----------------------------- parameter init --------------------------------
def init_params(key):
    stdv = 1.0 / math.sqrt(D)
    ks = jax.random.split(key, 8)
    uni = lambda k, shape: jax.random.uniform(k, shape, jnp.float32, -stdv, stdv)

    emb = uni(ks[0], (NUM_NODE, D))
    emb = emb.at[0].set(0.0)  # padding_idx=0

    # synthetic img/txt cluster features, normalized like VLGraph.normalize_array
    def normalize_array(a):
        a = np.asarray(a, np.float32)
        mn, mx = a.min(), a.max()
        return (a - mn) * (2 * stdv) / (mx - mn) - stdv

    img_feat = np.asarray(jax.random.normal(ks[6], (NUM_CLUSTER, D)))
    txt_feat = np.asarray(jax.random.normal(ks[7], (NUM_CLUSTER, D)))
    emb = emb.at[NUM_ITEM:NUM_ITEM + NUM_CLUSTER].set(
        jnp.asarray(normalize_array(img_feat)))
    emb = emb.at[NUM_ITEM + NUM_CLUSTER:NUM_ITEM + 2 * NUM_CLUSTER].set(
        jnp.asarray(normalize_array(txt_feat)))

    return {
        "embedding": emb,
        "pos_embedding": uni(ks[1], (POS_TABLE_SIZE, D)),
        "node_type_embedding": uni(ks[2], (NUM_TYPE, D)),
        "w_pos_type": uni(ks[3], (3 * D, D)),   # (len(auxiliary_info)+1)*D x D
        "w_gcn": uni(ks[4], (D, D)),
        "b_gcn": uni(ks[5], (1, D)),
    }


# ----------------------------- main -------------------------------------------
if __name__ == "__main__":
    key = jax.random.PRNGKey(0)
    k_par, k_nodes, k_type, k_pos, k_adj = jax.random.split(key, 5)

    params = init_params(k_par)

    nodes = jax.random.randint(k_nodes, (B, N), 0, NUM_NODE, dtype=jnp.int32)
    node_type_mask = jax.random.randint(k_type, (B, N), 0, NUM_TYPE, dtype=jnp.int32)
    node_pos_matrix = (jax.random.uniform(k_pos, (B, N, L)) > 0.5).astype(jnp.float32)
    adj = jax.random.uniform(k_adj, (B, N, N), jnp.float32)
    adj = adj / (jnp.sum(adj, -1, keepdims=True) + 1e-9)   # row-normalized adjacency

    out = vlgraph_forward(params, adj, nodes, node_type_mask, node_pos_matrix)
    out = jax.block_until_ready(out)

    ref = vlgraph_ref(params, adj, nodes, node_type_mask, node_pos_matrix)
    np.testing.assert_allclose(np.asarray(out), np.asarray(ref),
                               rtol=2e-5, atol=2e-5)

    print("KERNEL_OK")
</pallas_src>

<mosaic_0001>
module attributes {stable_mosaic.version = 11 : i64} {
  func.func @vlgraph_kernel(%arg0: i32, %arg1: memref<1x16x1xi32, #tpu.memory_space<vmem>>, %arg2: memref<1x16x1xi32, #tpu.memory_space<vmem>>, %arg3: memref<1x16x8xf32, #tpu.memory_space<vmem>>, %arg4: memref<1x16x16xf32, #tpu.memory_space<vmem>>, %arg5: memref<40x128xf32, #tpu.memory_space<vmem>>, %arg6: memref<8x128xf32, #tpu.memory_space<vmem>>, %arg7: memref<8x128xf32, #tpu.memory_space<vmem>>, %arg8: memref<128x128xf32, #tpu.memory_space<vmem>>, %arg9: memref<1x128xf32, #tpu.memory_space<vmem>>, %arg10: memref<1x16x128xf32, #tpu.memory_space<vmem>>) attributes {dimension_semantics = [#tpu.dimension_semantics<parallel>], iteration_bounds = array<i64: 2>, scalar_prefetch = 0 : i64, scratch_operands = 0 : i64, tpu.core_type = #tpu.core_type<tc>, window_params = [{transform_indices = @transform_0, window_bounds = array<i64: 1, 16, 1>}, {transform_indices = @transform_1, window_bounds = array<i64: 1, 16, 1>}, {transform_indices = @transform_2, window_bounds = array<i64: 1, 16, 8>}, {transform_indices = @transform_3, window_bounds = array<i64: 1, 16, 16>}, {pipeline_mode = #tpu.pipeline_mode<synchronous>, transform_indices = @transform_4, window_bounds = array<i64: 40, 128>}, {pipeline_mode = #tpu.pipeline_mode<synchronous>, transform_indices = @transform_5, window_bounds = array<i64: 8, 128>}, {pipeline_mode = #tpu.pipeline_mode<synchronous>, transform_indices = @transform_6, window_bounds = array<i64: 8, 128>}, {pipeline_mode = #tpu.pipeline_mode<synchronous>, transform_indices = @transform_7, window_bounds = array<i64: 128, 128>}, {pipeline_mode = #tpu.pipeline_mode<synchronous>, transform_indices = @transform_8, window_bounds = array<i64: 1, 128>}, {transform_indices = @transform_9, window_bounds = array<i64: 1, 16, 128>}]} {
    %c0 = arith.constant 0 : index
    %c0_0 = arith.constant 0 : index
    %c0_1 = arith.constant 0 : index
    %0 = vector.load %arg1[%c0, %c0_0, %c0_1] : memref<1x16x1xi32, #tpu.memory_space<vmem>>, vector<1x16x1xi32>
    %1 = vector.shape_cast %0 : vector<1x16x1xi32> to vector<16x1xi32>
    %c0_2 = arith.constant 0 : index
    %c0_3 = arith.constant 0 : index
    %c0_4 = arith.constant 0 : index
    %2 = vector.load %arg2[%c0_2, %c0_3, %c0_4] : memref<1x16x1xi32, #tpu.memory_space<vmem>>, vector<1x16x1xi32>
    %3 = vector.shape_cast %2 : vector<1x16x1xi32> to vector<16x1xi32>
    %c0_5 = arith.constant 0 : index
    %c0_6 = arith.constant 0 : index
    %c0_7 = arith.constant 0 : index
    %4 = vector.load %arg3[%c0_5, %c0_6, %c0_7] : memref<1x16x8xf32, #tpu.memory_space<vmem>>, vector<1x16x8xf32>
    %5 = vector.shape_cast %4 : vector<1x16x8xf32> to vector<16x8xf32>
    %c0_8 = arith.constant 0 : index
    %c0_9 = arith.constant 0 : index
    %c0_10 = arith.constant 0 : index
    %6 = vector.load %arg4[%c0_8, %c0_9, %c0_10] : memref<1x16x16xf32, #tpu.memory_space<vmem>>, vector<1x16x16xf32>
    %7 = vector.shape_cast %6 : vector<1x16x16xf32> to vector<16x16xf32>
    %8 = tpu.iota {dimensions = array<i32: 1>} : vector<16x40xi32>
    %9 = vector.broadcast %1 : vector<16x1xi32> to vector<16x40xi32>
    %10 = arith.cmpi eq, %8, %9 : vector<16x40xi32>
    %11 = arith.extui %10 : vector<16x40xi1> to vector<16x40xi32>
    %12 = arith.sitofp %11 : vector<16x40xi32> to vector<16x40xf32>
    %13 = tpu.iota {dimensions = array<i32: 1>} : vector<16x8xi32>
    %14 = vector.broadcast %3 : vector<16x1xi32> to vector<16x8xi32>
    %15 = arith.cmpi eq, %13, %14 : vector<16x8xi32>
    %16 = arith.extui %15 : vector<16x8xi1> to vector<16x8xi32>
    %17 = arith.sitofp %16 : vector<16x8xi32> to vector<16x8xf32>
    %c0_i32 = arith.constant 0 : i32
    %18 = vector.broadcast %c0_i32 : i32 to vector<16x1xi32>
    %19 = arith.cmpi sgt, %3, %18 : vector<16x1xi32>
    %20 = arith.extui %19 : vector<16x1xi1> to vector<16x1xi32>
    %21 = arith.sitofp %20 : vector<16x1xi32> to vector<16x1xf32>
    %cst = arith.constant dense<0.000000e+00> : vector<16xf32>
    %22 = vector.multi_reduction <add>, %5, %cst [1] : vector<16x8xf32> to vector<16xf32>
    %23 = vector.shape_cast %22 : vector<16xf32> to vector<16x1xf32>
    %cst_11 = arith.constant 9.99999971E-10 : f32
    %24 = vector.broadcast %cst_11 : f32 to vector<16x1xf32>
    %25 = arith.addf %23, %24 : vector<16x1xf32>
    %26 = arith.divf %21, %25 : vector<16x1xf32>
    %c0_12 = arith.constant 0 : index
    %c0_13 = arith.constant 0 : index
    %27 = vector.load %arg5[%c0_12, %c0_13] : memref<40x128xf32, #tpu.memory_space<vmem>>, vector<40x128xf32>
    %cst_14 = arith.constant dense<0.000000e+00> : vector<16x128xf32>
    %28 = tpu.matmul %12, %27, %cst_14 {dimension_numbers = #tpu.dot_dimension_numbers<[1], [0], [0], [1], [0, 0, 1, 1], [], []>} : vector<16x40xf32>, vector<40x128xf32>, vector<16x128xf32> -> vector<16x128xf32>
    %c0_15 = arith.constant 0 : index
    %c0_16 = arith.constant 0 : index
    %29 = vector.load %arg6[%c0_15, %c0_16] : memref<8x128xf32, #tpu.memory_space<vmem>>, vector<8x128xf32>
    %cst_17 = arith.constant dense<0.000000e+00> : vector<16x128xf32>
    %30 = tpu.matmul %17, %29, %cst_17 {dimension_numbers = #tpu.dot_dimension_numbers<[1], [0], [0], [1], [0, 0, 1, 1], [], []>} : vector<16x8xf32>, vector<8x128xf32>, vector<16x128xf32> -> vector<16x128xf32>
    %31 = arith.addf %28, %30 : vector<16x128xf32>
    %c0_18 = arith.constant 0 : index
    %c0_19 = arith.constant 0 : index
    %32 = vector.load %arg7[%c0_18, %c0_19] : memref<8x128xf32, #tpu.memory_space<vmem>>, vector<8x128xf32>
    %cst_20 = arith.constant dense<0.000000e+00> : vector<16x128xf32>
    %33 = tpu.matmul %5, %32, %cst_20 {dimension_numbers = #tpu.dot_dimension_numbers<[1], [0], [0], [1], [0, 0, 1, 1], [], []>} : vector<16x8xf32>, vector<8x128xf32>, vector<16x128xf32> -> vector<16x128xf32>
    %34 = vector.broadcast %26 : vector<16x1xf32> to vector<16x128xf32>
    %35 = arith.mulf %34, %33 : vector<16x128xf32>
    %36 = arith.addf %31, %35 : vector<16x128xf32>
    %c0_21 = arith.constant 0 : index
    %c0_22 = arith.constant 0 : index
    %37 = vector.load %arg8[%c0_21, %c0_22] : memref<128x128xf32, #tpu.memory_space<vmem>>, vector<128x128xf32>
    %c0_23 = arith.constant 0 : index
    %c0_24 = arith.constant 0 : index
    %38 = vector.load %arg9[%c0_23, %c0_24] : memref<1x128xf32, #tpu.memory_space<vmem>>, vector<1x128xf32>
    %39 = vector.shape_cast %38 : vector<1x128xf32> to vector<1x128xf32>
    %40 = vector.broadcast %39 : vector<1x128xf32> to vector<16x128xf32>
    %41 = vector.shape_cast %21 : vector<16x1xf32> to vector<16x1xf32>
    %42 = vector.broadcast %41 : vector<16x1xf32> to vector<16x128xf32>
    %cst_25 = arith.constant dense<0.000000e+00> : vector<16x128xf32>
    %43 = tpu.matmul %7, %36, %cst_25 {dimension_numbers = #tpu.dot_dimension_numbers<[1], [0], [0], [1], [0, 0, 1, 1], [], []>} : vector<16x16xf32>, vector<16x128xf32>, vector<16x128xf32> -> vector<16x128xf32>
    %cst_26 = arith.constant dense<0.000000e+00> : vector<16x128xf32>
    %44 = tpu.matmul %43, %37, %cst_26 {dimension_numbers = #tpu.dot_dimension_numbers<[1], [0], [0], [1], [0, 0, 1, 1], [], []>} : vector<16x128xf32>, vector<128x128xf32>, vector<16x128xf32> -> vector<16x128xf32>
    %45 = arith.addf %44, %40 : vector<16x128xf32>
    %cst_27 = arith.constant 0.000000e+00 : f32
    %46 = vector.broadcast %cst_27 : f32 to vector<16x128xf32>
    %47 = arith.maximumf %45, %46 : vector<16x128xf32>
    %48 = arith.mulf %47, %42 : vector<16x128xf32>
    %cst_28 = arith.constant dense<0.000000e+00> : vector<16x128xf32>
    %49 = tpu.matmul %7, %48, %cst_28 {dimension_numbers = #tpu.dot_dimension_numbers<[1], [0], [0], [1], [0, 0, 1, 1], [], []>} : vector<16x16xf32>, vector<16x128xf32>, vector<16x128xf32> -> vector<16x128xf32>
    %cst_29 = arith.constant dense<0.000000e+00> : vector<16x128xf32>
    %50 = tpu.matmul %49, %37, %cst_29 {dimension_numbers = #tpu.dot_dimension_numbers<[1], [0], [0], [1], [0, 0, 1, 1], [], []>} : vector<16x128xf32>, vector<128x128xf32>, vector<16x128xf32> -> vector<16x128xf32>
    %51 = arith.addf %50, %40 : vector<16x128xf32>
    %cst_30 = arith.constant 0.000000e+00 : f32
    %52 = vector.broadcast %cst_30 : f32 to vector<16x128xf32>
    %53 = arith.maximumf %51, %52 : vector<16x128xf32>
    %54 = arith.mulf %53, %42 : vector<16x128xf32>
    %55 = vector.shape_cast %54 : vector<16x128xf32> to vector<1x16x128xf32>
    %c0_31 = arith.constant 0 : index
    %c0_32 = arith.constant 0 : index
    %c0_33 = arith.constant 0 : index
    %56 = vector.load %arg10[%c0_31, %c0_32, %c0_33] : memref<1x16x128xf32, #tpu.memory_space<vmem>>, vector<1x16x128xf32>
    tpu.vector_store %arg10[%c0_31, %c0_32, %c0_33], %55 {strides = array<i32>} : memref<1x16x128xf32, #tpu.memory_space<vmem>>, vector<1x16x128xf32>,
    return
  }
  func.func @transform_0(%arg0: i32) -> (i32, i32, i32) {
    %c0_i32 = arith.constant 0 : i32
    %c0_i32_0 = arith.constant 0 : i32
    %c0_i32_1 = arith.constant 0 : i32
    return %arg0, %c0_i32, %c0_i32_0 : i32, i32, i32
  }
  func.func @transform_1(%arg0: i32) -> (i32, i32, i32) {
    %c0_i32 = arith.constant 0 : i32
    %c0_i32_0 = arith.constant 0 : i32
    %c0_i32_1 = arith.constant 0 : i32
    return %arg0, %c0_i32, %c0_i32_0 : i32, i32, i32
  }
  func.func @transform_2(%arg0: i32) -> (i32, i32, i32) {
    %c0_i32 = arith.constant 0 : i32
    %c0_i32_0 = arith.constant 0 : i32
    %c0_i32_1 = arith.constant 0 : i32
    return %arg0, %c0_i32, %c0_i32_0 : i32, i32, i32
  }
  func.func @transform_3(%arg0: i32) -> (i32, i32, i32) {
    %c0_i32 = arith.constant 0 : i32
    %c0_i32_0 = arith.constant 0 : i32
    %c0_i32_1 = arith.constant 0 : i32
    return %arg0, %c0_i32, %c0_i32_0 : i32, i32, i32
  }
  func.func @transform_4(%arg0: i32) -> (i32, i32) {
    %c0_i32 = arith.constant 0 : i32
    %c0_i32_0 = arith.constant 0 : i32
    %c0_i32_1 = arith.constant 0 : i32
    return %c0_i32, %c0_i32_0 : i32, i32
  }
  func.func @transform_5(%arg0: i32) -> (i32, i32) {
    %c0_i32 = arith.constant 0 : i32
    %c0_i32_0 = arith.constant 0 : i32
    %c0_i32_1 = arith.constant 0 : i32
    return %c0_i32, %c0_i32_0 : i32, i32
  }
  func.func @transform_6(%arg0: i32) -> (i32, i32) {
    %c0_i32 = arith.constant 0 : i32
    %c0_i32_0 = arith.constant 0 : i32
    %c0_i32_1 = arith.constant 0 : i32
    return %c0_i32, %c0_i32_0 : i32, i32
  }
  func.func @transform_7(%arg0: i32) -> (i32, i32) {
    %c0_i32 = arith.constant 0 : i32
    %c0_i32_0 = arith.constant 0 : i32
    %c0_i32_1 = arith.constant 0 : i32
    return %c0_i32, %c0_i32_0 : i32, i32
  }
  func.func @transform_8(%arg0: i32) -> (i32, i32) {
    %c0_i32 = arith.constant 0 : i32
    %c0_i32_0 = arith.constant 0 : i32
    %c0_i32_1 = arith.constant 0 : i32
    return %c0_i32, %c0_i32_0 : i32, i32
  }
  func.func @transform_9(%arg0: i32) -> (i32, i32, i32) {
    %c0_i32 = arith.constant 0 : i32
    %c0_i32_0 = arith.constant 0 : i32
    %c0_i32_1 = arith.constant 0 : i32
    return %arg0, %c0_i32, %c0_i32_0 : i32, i32, i32
  }
}

</mosaic_0001>

<llo_original>
// kernel: vlgraph_forward.1
$region0: #{vlgraph_forward.1}
  #allocation0 [shape = 'u32[]', space=smem, size = 0x4, offset = 0x4, fixed_abs, tag = 'smem constant byte address 0x4 - core index']
  #allocation1 [shape = 'u32[144,128]{1,0:T(1,128)}', space=vmem, size = 0x12000, scoped, tag = 'internal scratch']
  %s0 = inlined_call_operand.vmem [shape: s32[2,16,1], index: 0, kind: input, shape index: {}]
  %s1 = inlined_call_operand.vmem [shape: s32[2,16,1], index: 1, kind: input, shape index: {}]
  %s2 = inlined_call_operand.vmem [shape: f32[2,16,8], index: 2, kind: input, shape index: {}]
  %s3 = inlined_call_operand.vmem [shape: f32[2,16,16], index: 3, kind: input, shape index: {}]
  %s4 = inlined_call_operand.vmem [shape: f32[40,128], index: 4, kind: input, shape index: {}]
  %s5 = inlined_call_operand.vmem [shape: f32[8,128], index: 5, kind: input, shape index: {}]
  %s6 = inlined_call_operand.vmem [shape: f32[8,128], index: 6, kind: input, shape index: {}]
  %s7 = inlined_call_operand.vmem [shape: f32[128,128], index: 7, kind: input, shape index: {}]
  %s8 = inlined_call_operand.vmem [shape: f32[1,128], index: 8, kind: input, shape index: {}]
  %s9 = inlined_call_operand.hbm [shape: f32[2,16,128], index: 9, kind: output, shape index: {}]
  %s10 = sld [smem:[#allocation0]]
  $region69: #{vlgraph_forward.1} parent=0
    _
  %s12 = ssub.s32 1, %s10
  %s13 = scalar_select 0, %s12, %s10
  $region1: #{vlgraph_forward.1} parent=0
    #allocation2 [shape = 'u8[16384]{0}', space=vmem, size = 0x4000, scoped, tag = 'output window, operand 0']
    #allocation3 [shape = 's32[2]{0}', space=sflag, size = 0x8, scoped, tag = 'scoped memory for vlgraph_forward.1']
    %14 = vsyncpa [#allocation3], 0
    %s15 = scalar_lea.sflag [#allocation3], 1
    %16 = vsyncpa %s15, 0
    loop: start=0, step=1, limit=4
    $region2: #{vlgraph_forward.1} parent=1 // loop_pre_header
      _
    $region3: #{vlgraph_forward.1} parent=1 // loop_header
      %s18 = sphi 0, %s22
      %p19 = scmp.ge.s32.totalorder %s18, 4
      %s28 = sphi 0, %s30
      %s31 = sphi 0, %s28
      %s32 = sphi 0, %s31
      %s48 = sphi 0, %s32
      %s54 = sphi 0, %s56
      %s57 = sphi 0, %s54
      %s58 = sphi 0, %s57
      %s74 = sphi 0, %s58
      %s80 = sphi 0, %s82
      %s83 = sphi 0, %s80
      %s84 = sphi 0, %s83
      %s100 = sphi 0, %s84
      %s106 = sphi 0, %s108
      %s109 = sphi 0, %s106
      %s110 = sphi 0, %s109
      %s126 = sphi 0, %s110
      %s130 = sphi 0, %s130
      %s132 = sphi 0, %s130
      %s133 = sphi 0, %s132
      %s147 = sphi 0, %s133
      %s151 = sphi 0, %s151
      %s153 = sphi 0, %s151
      %s154 = sphi 0, %s153
      %s168 = sphi 0, %s154
      %s172 = sphi 0, %s172
      %s174 = sphi 0, %s172
      %s175 = sphi 0, %s174
      %s189 = sphi 0, %s175
      %s193 = sphi 0, %s193
      %s195 = sphi 0, %s193
      %s196 = sphi 0, %s195
      %s210 = sphi 0, %s196
      %s214 = sphi 0, %s214
      %s216 = sphi 0, %s214
      %s217 = sphi 0, %s216
      %s231 = sphi 0, %s217
      %s237 = sphi 0, %s239
      %s240 = sphi 0, %s237
      %s241 = sphi 0, %s240
      %s257 = sphi 0, %s241
    $region4: #{vlgraph_forward.1} parent=1 // loop_header_branch
      %21 = sbr.rel (%p19) target = $region8
    $region5: #{vlgraph_forward.1} parent=1 // loop_body
      %s23 = ssub.s32 %s18, 1
      %s24 = ssub.s32 %s18, 2
      %s25 = sadd.s32 %s18, 1
      %s26 = ssub.s32 %s18, %s25
      %p27 = scmp.eq.s32.totalorder %s26, 0
      %s29 = sadd.s32 %s28, 1
      %s30 = scalar_select %p27, %s28, %s29
      %p33 = pneg %p27
      %p34 = scmp.eq.s32.totalorder %s18, 1
      %p35 = por %p33, %p34
      %p36 = scmp.ne.s32.totalorder %s28, %s31
      %p37 = scmp.eq.s32.totalorder %s18, 0
      %p38 = por %p36, %p37
      %p39 = scmp.ne.s32.totalorder %s28, %s31
      %p40 = scmp.eq.s32.totalorder %s23, 1
      %p41 = por %p39, %p40
      %p42 = scmp.ne.s32.totalorder %s31, %s32
      %p43 = scmp.eq.s32.totalorder %s23, 0
      %p44 = por %p42, %p43
      %p45 = scmp.ne.s32.totalorder %s31, %s32
      %p46 = scmp.eq.s32.totalorder %s24, 1
      %p47 = por %p45, %p46
      %p49 = scmp.ne.s32.totalorder %s32, %s48
      %p50 = scmp.eq.s32.totalorder %s24, 0
      %p51 = por %p49, %p50
      %s52 = ssub.s32 %s18, %s25
      %p53 = scmp.eq.s32.totalorder %s52, 0
      %s55 = sadd.s32 %s54, 1
      %s56 = scalar_select %p53, %s54, %s55
      %p59 = pneg %p53
      %p60 = scmp.eq.s32.totalorder %s18, 1
      %p61 = por %p59, %p60
      %p62 = scmp.ne.s32.totalorder %s54, %s57
      %p63 = scmp.eq.s32.totalorder %s18, 0
      %p64 = por %p62, %p63
      %p65 = scmp.ne.s32.totalorder %s54, %s57
      %p66 = scmp.eq.s32.totalorder %s23, 1
      %p67 = por %p65, %p66
      %p68 = scmp.ne.s32.totalorder %s57, %s58
      %p69 = scmp.eq.s32.totalorder %s23, 0
      %p70 = por %p68, %p69
      %p71 = scmp.ne.s32.totalorder %s57, %s58
      %p72 = scmp.eq.s32.totalorder %s24, 1
      %p73 = por %p71, %p72
      %p75 = scmp.ne.s32.totalorder %s58, %s74
      %p76 = scmp.eq.s32.totalorder %s24, 0
      %p77 = por %p75, %p76
      %s78 = ssub.s32 %s18, %s25
      %p79 = scmp.eq.s32.totalorder %s78, 0
      %s81 = sadd.s32 %s80, 1
      %s82 = scalar_select %p79, %s80, %s81
      %p85 = pneg %p79
      %p86 = scmp.eq.s32.totalorder %s18, 1
      %p87 = por %p85, %p86
      %p88 = scmp.ne.s32.totalorder %s80, %s83
      %p89 = scmp.eq.s32.totalorder %s18, 0
      %p90 = por %p88, %p89
      %p91 = scmp.ne.s32.totalorder %s80, %s83
      %p92 = scmp.eq.s32.totalorder %s23, 1
      %p93 = por %p91, %p92
      %p94 = scmp.ne.s32.totalorder %s83, %s84
      %p95 = scmp.eq.s32.totalorder %s23, 0
      %p96 = por %p94, %p95
      %p97 = scmp.ne.s32.totalorder %s83, %s84
      %p98 = scmp.eq.s32.totalorder %s24, 1
      %p99 = por %p97, %p98
      %p101 = scmp.ne.s32.totalorder %s84, %s100
      %p102 = scmp.eq.s32.totalorder %s24, 0
      %p103 = por %p101, %p102
      %s104 = ssub.s32 %s18, %s25
      %p105 = scmp.eq.s32.totalorder %s104, 0
      %s107 = sadd.s32 %s106, 1
      %s108 = scalar_select %p105, %s106, %s107
      %p111 = pneg %p105
      %p112 = scmp.eq.s32.totalorder %s18, 1
      %p113 = por %p111, %p112
      %p114 = scmp.ne.s32.totalorder %s106, %s109
      %p115 = scmp.eq.s32.totalorder %s18, 0
      %p116 = por %p114, %p115
      %p117 = scmp.ne.s32.totalorder %s106, %s109
      %p118 = scmp.eq.s32.totalorder %s23, 1
      %p119 = por %p117, %p118
      %p120 = scmp.ne.s32.totalorder %s109, %s110
      %p121 = scmp.eq.s32.totalorder %s23, 0
      %p122 = por %p120, %p121
      %p123 = scmp.ne.s32.totalorder %s109, %s110
      %p124 = scmp.eq.s32.totalorder %s24, 1
      %p125 = por %p123, %p124
      %p127 = scmp.ne.s32.totalorder %s110, %s126
      %p128 = scmp.eq.s32.totalorder %s24, 0
      %p129 = por %p127, %p128
      %s131 = sadd.s32 %s130, 1
      %p134 = scmp.eq.s32.totalorder %s18, 1
      %p135 = scmp.ne.s32.totalorder %s130, %s132
      %p136 = scmp.eq.s32.totalorder %s18, 0
      %p137 = por %p135, %p136
      %p138 = scmp.ne.s32.totalorder %s130, %s132
      %p139 = scmp.eq.s32.totalorder %s23, 1
      %p140 = por %p138, %p139
      %p141 = scmp.ne.s32.totalorder %s132, %s133
      %p142 = scmp.eq.s32.totalorder %s23, 0
      %p143 = por %p141, %p142
      %p144 = scmp.ne.s32.totalorder %s132, %s133
      %p145 = scmp.eq.s32.totalorder %s24, 1
      %p146 = por %p144, %p145
      %p148 = scmp.ne.s32.totalorder %s133, %s147
      %p149 = scmp.eq.s32.totalorder %s24, 0
      %p150 = por %p148, %p149
      %s152 = sadd.s32 %s151, 1
      %p155 = scmp.eq.s32.totalorder %s18, 1
      %p156 = scmp.ne.s32.totalorder %s151, %s153
      %p157 = scmp.eq.s32.totalorder %s18, 0
      %p158 = por %p156, %p157
      %p159 = scmp.ne.s32.totalorder %s151, %s153
      %p160 = scmp.eq.s32.totalorder %s23, 1
      %p161 = por %p159, %p160
      %p162 = scmp.ne.s32.totalorder %s153, %s154
      %p163 = scmp.eq.s32.totalorder %s23, 0
      %p164 = por %p162, %p163
      %p165 = scmp.ne.s32.totalorder %s153, %s154
      %p166 = scmp.eq.s32.totalorder %s24, 1
      %p167 = por %p165, %p166
      %p169 = scmp.ne.s32.totalorder %s154, %s168
      %p170 = scmp.eq.s32.totalorder %s24, 0
      %p171 = por %p169, %p170
      %s173 = sadd.s32 %s172, 1
      %p176 = scmp.eq.s32.totalorder %s18, 1
      %p177 = scmp.ne.s32.totalorder %s172, %s174
      %p178 = scmp.eq.s32.totalorder %s18, 0
      %p179 = por %p177, %p178
      %p180 = scmp.ne.s32.totalorder %s172, %s174
      %p181 = scmp.eq.s32.totalorder %s23, 1
      %p182 = por %p180, %p181
      %p183 = scmp.ne.s32.totalorder %s174, %s175
      %p184 = scmp.eq.s32.totalorder %s23, 0
      %p185 = por %p183, %p184
      %p186 = scmp.ne.s32.totalorder %s174, %s175
      %p187 = scmp.eq.s32.totalorder %s24, 1
      %p188 = por %p186, %p187
      %p190 = scmp.ne.s32.totalorder %s175, %s189
      %p191 = scmp.eq.s32.totalorder %s24, 0
      %p192 = por %p190, %p191
      %s194 = sadd.s32 %s193, 1
      %p197 = scmp.eq.s32.totalorder %s18, 1
      %p198 = scmp.ne.s32.totalorder %s193, %s195
      %p199 = scmp.eq.s32.totalorder %s18, 0
      %p200 = por %p198, %p199
      %p201 = scmp.ne.s32.totalorder %s193, %s195
      %p202 = scmp.eq.s32.totalorder %s23, 1
      %p203 = por %p201, %p202
      %p204 = scmp.ne.s32.totalorder %s195, %s196
      %p205 = scmp.eq.s32.totalorder %s23, 0
      %p206 = por %p204, %p205
      %p207 = scmp.ne.s32.totalorder %s195, %s196
      %p208 = scmp.eq.s32.totalorder %s24, 1
      %p209 = por %p207, %p208
      %p211 = scmp.ne.s32.totalorder %s196, %s210
      %p212 = scmp.eq.s32.totalorder %s24, 0
      %p213 = por %p211, %p212
      %s215 = sadd.s32 %s214, 1
      %p218 = scmp.eq.s32.totalorder %s18, 1
      %p219 = scmp.ne.s32.totalorder %s214, %s216
      %p220 = scmp.eq.s32.totalorder %s18, 0
      %p221 = por %p219, %p220
      %p222 = scmp.ne.s32.totalorder %s214, %s216
      %p223 = scmp.eq.s32.totalorder %s23, 1
      %p224 = por %p222, %p223
      %p225 = scmp.ne.s32.totalorder %s216, %s217
      %p226 = scmp.eq.s32.totalorder %s23, 0
      %p227 = por %p225, %p226
      %p228 = scmp.ne.s32.totalorder %s216, %s217
      %p229 = scmp.eq.s32.totalorder %s24, 1
      %p230 = por %p228, %p229
      %p232 = scmp.ne.s32.totalorder %s217, %s231
      %p233 = scmp.eq.s32.totalorder %s24, 0
      %p234 = por %p232, %p233
      %s235 = ssub.s32 %s18, %s25
      %p236 = scmp.eq.s32.totalorder %s235, 0
      %s238 = sadd.s32 %s237, 1
      %s239 = scalar_select %p236, %s237, %s238
      %p242 = pneg %p236
      %p243 = scmp.eq.s32.totalorder %s18, 1
      %p244 = por %p242, %p243
      %p245 = scmp.ne.s32.totalorder %s237, %s240
      %p246 = scmp.eq.s32.totalorder %s18, 0
      %p247 = por %p245, %p246
      %p248 = scmp.ne.s32.totalorder %s237, %s240
      %p249 = scmp.eq.s32.totalorder %s23, 1
      %p250 = por %p248, %p249
      %p251 = scmp.ne.s32.totalorder %s240, %s241
      %p252 = scmp.eq.s32.totalorder %s23, 0
      %p253 = por %p251, %p252
      %p254 = scmp.ne.s32.totalorder %s240, %s241
      %p255 = scmp.eq.s32.totalorder %s24, 1
      %p256 = por %p254, %p255
      %p258 = scmp.ne.s32.totalorder %s241, %s257
      %p259 = scmp.eq.s32.totalorder %s24, 0
      %p260 = por %p258, %p259
      %p261 = scmp.le.s32.totalorder 1, %s18
      %p262 = scmp.lt.s32.totalorder %s18, 3
      %p263 = pnand %p261, %p262
      %p264 = pneg %p263
      // Predicated region
      $region9: #{vlgraph_forward.1} parent=5 // pred_check
        _
      $region10: #{vlgraph_forward.1} parent=5 // pred_check_branch
        %266 = sbr.rel (%p263) target = $region12
      $region11: #{vlgraph_forward.1} parent=5 // pred_region
        %s267 = ssub.s32 %s18, 1
        // Predicated region
        $region13: #{vlgraph_forward.1} parent=11 // pred_check
          %p268 = pneg %p143
        $region14: #{vlgraph_forward.1} parent=11 // pred_check_branch
          %270 = sbr.rel (%p268) target = $region16
        $region15: #{vlgraph_forward.1} parent=11 // pred_region
          _
        $region16: #{vlgraph_forward.1} parent=11 // pred_fallthru
          _
        // Predicated region
        $region17: #{vlgraph_forward.1} parent=11 // pred_check
          %p271 = pneg %p164
        $region18: #{vlgraph_forward.1} parent=11 // pred_check_branch
          %273 = sbr.rel (%p271) target = $region20
        $region19: #{vlgraph_forward.1} parent=11 // pred_region
          _
        $region20: #{vlgraph_forward.1} parent=11 // pred_fallthru
          _
        // Predicated region
        $region21: #{vlgraph_forward.1} parent=11 // pred_check
          %p274 = pneg %p185
        $region22: #{vlgraph_forward.1} parent=11 // pred_check_branch
          %276 = sbr.rel (%p274) target = $region24
        $region23: #{vlgraph_forward.1} parent=11 // pred_region
          _
        $region24: #{vlgraph_forward.1} parent=11 // pred_fallthru
          _
        // Predicated region
        $region25: #{vlgraph_forward.1} parent=11 // pred_check
          %p277 = pneg %p206
        $region26: #{vlgraph_forward.1} parent=11 // pred_check_branch
          %279 = sbr.rel (%p277) target = $region28
        $region27: #{vlgraph_forward.1} parent=11 // pred_region
          _
        $region28: #{vlgraph_forward.1} parent=11 // pred_fallthru
          _
        // Predicated region
        $region29: #{vlgraph_forward.1} parent=11 // pred_check
          %p280 = pneg %p227
        $region30: #{vlgraph_forward.1} parent=11 // pred_check_branch
          %282 = sbr.rel (%p280) target = $region32
        $region31: #{vlgraph_forward.1} parent=11 // pred_region
          _
        $region32: #{vlgraph_forward.1} parent=11 // pred_fallthru
          _
      $region12: #{vlgraph_forward.1} parent=5 // pred_fallthru
        _
      %p283 = scmp.lt.s32.totalorder %s18, 2
      // Predicated region
      $region33: #{vlgraph_forward.1} parent=5 // pred_check
        %p284 = pneg %p283
      $region34: #{vlgraph_forward.1} parent=5 // pred_check_branch
        %286 = sbr.rel (%p284) target = $region36
      $region35: #{vlgraph_forward.1} parent=5 // pred_region
        // Predicated region
        $region37: #{vlgraph_forward.1} parent=35 // pred_check
          %p287 = pneg %p38
        $region38: #{vlgraph_forward.1} parent=35 // pred_check_branch
          %289 = sbr.rel (%p287) target = $region40
        $region39: #{vlgraph_forward.1} parent=35 // pred_region
          %p290 = scmp.lt.s32.totalorder %s18, 1
          %s291 = scalar_select %p290, %s18, 1
          %s292 = smul.addr %s291, 2
          %s293 = smul.addr %s292, 8
          %s294 = scalar_lea.vmem %s0, %s293
        $region40: #{vlgraph_forward.1} parent=35 // pred_fallthru
          _
        // Predicated region
        $region41: #{vlgraph_forward.1} parent=35 // pred_check
          %p295 = pneg %p64
        $region42: #{vlgraph_forward.1} parent=35 // pred_check_branch
          %297 = sbr.rel (%p295) target = $region44
        $region43: #{vlgraph_forward.1} parent=35 // pred_region
          %p298 = scmp.lt.s32.totalorder %s18, 1
          %s299 = scalar_select %p298, %s18, 1
          %s300 = smul.addr %s299, 2
          %s301 = smul.addr %s300, 8
          %s302 = scalar_lea.vmem %s1, %s301
        $region44: #{vlgraph_forward.1} parent=35 // pred_fallthru
          _
        // Predicated region
        $region45: #{vlgraph_forward.1} parent=35 // pred_check
          %p303 = pneg %p90
        $region46: #{vlgraph_forward.1} parent=35 // pred_check_branch
          %305 = sbr.rel (%p303) target = $region48
        $region47: #{vlgraph_forward.1} parent=35 // pred_region
          %p306 = scmp.lt.s32.totalorder %s18, 1
          %s307 = scalar_select %p306, %s18, 1
          %s308 = smul.addr %s307, 2
          %s309 = smul.addr %s308, 8
          %s310 = scalar_lea.vmem %s2, %s309
        $region48: #{vlgraph_forward.1} parent=35 // pred_fallthru
          _
        // Predicated region
        $region49: #{vlgraph_forward.1} parent=35 // pred_check
          %p311 = pneg %p116
        $region50: #{vlgraph_forward.1} parent=35 // pred_check_branch
          %313 = sbr.rel (%p311) target = $region52
        $region51: #{vlgraph_forward.1} parent=35 // pred_region
          %p314 = scmp.lt.s32.totalorder %s18, 1
          %s315 = scalar_select %p314, %s18, 1
          %s316 = smul.addr %s315, 2
          %s317 = smul.addr %s316, 8
          %s318 = scalar_lea.vmem %s3, %s317
        $region52: #{vlgraph_forward.1} parent=35 // pred_fallthru
          _
      $region36: #{vlgraph_forward.1} parent=5 // pred_fallthru
        _
      %p319 = scmp.le.s32.totalorder 1, %s18
      %p320 = scmp.lt.s32.totalorder %s18, 3
      %p321 = pnand %p319, %p320
      %p322 = pneg %p321
      // Predicated region
      $region53: #{vlgraph_forward.1} parent=5 // pred_check
        _
      $region54: #{vlgraph_forward.1} parent=5 // pred_check_branch
        %324 = sbr.rel (%p321) target = $region56
      $region55: #{vlgraph_forward.1} parent=5 // pred_region
        %s325 = ssub.s32 %s18, 1
        %p326 = scmp.lt.s32.totalorder %s23, 1
        %s327 = scalar_select %p326, %s23, 1
        %s328 = smul.addr %s327, 2
        %s329 = smul.addr %s328, 8
        %s330 = scalar_lea.vmem %s0, %s329
        %p331 = pneg %p44
        %p332 = pneg %p41
        %p333 = scmp.lt.s32.totalorder %s23, 1
        %s334 = scalar_select %p333, %s23, 1
        %s335 = smul.addr %s334, 2
        %s336 = smul.addr %s335, 8
        %s337 = scalar_lea.vmem %s1, %s336
        %p338 = pneg %p70
        %p339 = pneg %p67
        %p340 = scmp.lt.s32.totalorder %s23, 1
        %s341 = scalar_select %p340, %s23, 1
        %s342 = smul.addr %s341, 2
        %s343 = smul.addr %s342, 8
        %s344 = scalar_lea.vmem %s2, %s343
        %p345 = pneg %p96
        %p346 = pneg %p93
        %p347 = scmp.lt.s32.totalorder %s23, 1
        %s348 = scalar_select %p347, %s23, 1
        %s349 = smul.addr %s348, 2
        %s350 = smul.addr %s349, 8
        %s351 = scalar_lea.vmem %s3, %s350
        %p352 = pneg %p122
        %p353 = pneg %p119
        %p354 = pneg %p143
        %p355 = pneg %p140
        %p356 = pneg %p164
        %p357 = pneg %p161
        %p358 = pneg %p185
        %p359 = pneg %p182
        %p360 = pneg %p206
        %p361 = pneg %p203
        %p362 = pneg %p227
        %p363 = pneg %p224
        %p364 = pneg %p253
        %p365 = pneg %p250
        %s366 = sand.u32 %s240, 1
        %s367 = scalar_lea.sflag [#allocation3], %s366
        %s368 = sand.u32 %s240, 1
        %s369 = smul.addr %s368, 16
        %s370 = scalar_lea.vmem [#allocation2], %s369
        %p371 = scmp.lt.s32.totalorder %s23, 1
        %s372 = scalar_select %p371, %s23, 1
        %s373 = smul.addr %s372, 2
        %s374 = smul.addr %s373, 8
        %s375 = scalar_lea.vmem %s0, %s374
        %p376 = scmp.lt.s32.totalorder %s23, 1
        %s377 = scalar_select %p376, %s23, 1
        %s378 = smul.addr %s377, 2
        %s379 = smul.addr %s378, 8
        %s380 = scalar_lea.vmem %s1, %s379
        %p381 = scmp.lt.s32.totalorder %s23, 1
        %s382 = scalar_select %p381, %s23, 1
        %s383 = smul.addr %s382, 2
        %s384 = smul.addr %s383, 8
        %s385 = scalar_lea.vmem %s2, %s384
        %p386 = scmp.lt.s32.totalorder %s23, 1
        %s387 = scalar_select %p386, %s23, 1
        %s388 = smul.addr %s387, 2
        %s389 = smul.addr %s388, 8
        %s390 = scalar_lea.vmem %s3, %s389
        %v391 = vld [vmem:[%s375] sm:$0xff]
        %v392 = vld [vmem:[%s375 + $0x8] sm:$0xff]
        %v393 = vld [vmem:[%s380] sm:$0xff]
        %v394 = vld [vmem:[%s380 + $0x8] sm:$0xff]
        %v395 = vld [vmem:[%s385] sm:$0xff]
        %v396 = vld [vmem:[%s385 + $0x8] sm:$0xff]
        %v397 = vld [vmem:[%s390] sm:$0xff]
        %v398 = vld [vmem:[%s390 + $0x8] sm:$0xff]
        %v399 = vlaneseq
        %v400 = vand.u32 %v399, 127
        %401 = vset.pattern.permute.xlu0 0
        %402 = vperm.xlu0 %401, %v391
        %v403 = vpop.permute.xlu0 %402
        %404 = vset.pattern.permute.xlu0 0
        %405 = vperm.xlu0 %404, %v392
        %v406 = vpop.permute.xlu0 %405
        %vm407 = vcmp.eq.s32.totalorder %v400, %v403
        %vm408 = vcmp.eq.s32.totalorder %v400, %v406
        %v409 = vsel %vm407, 1, 0
        %v410 = vsel %vm408, 1, 0
        %v411 = vcvt.s32.f32 %v409
        %v412 = vcvt.s32.f32 %v410
        %413 = vset.pattern.permute.xlu0 0
        %414 = vperm.xlu0 %413, %v393
        %v415 = vpop.permute.xlu0 %414
        %416 = vset.pattern.permute.xlu0 0
        %417 = vperm.xlu0 %416, %v394
        %v418 = vpop.permute.xlu0 %417
        %vm419 = vcmp.eq.s32.totalorder %v400, %v415
        %vm420 = vcmp.eq.s32.totalorder %v400, %v418
        %v421 = vsel %vm419, 1, 0
        %v422 = vsel %vm420, 1, 0
        %v423 = vcvt.s32.f32 %v421
        %v424 = vcvt.s32.f32 %v422
        %vm425 = vcmp.gt.s32.totalorder %v393, 0
        %vm426 = vcmp.gt.s32.totalorder %v394, 0
        %v427 = vsel %vm425, 1, 0
        %v428 = vsel %vm426, 1, 0
        %v429 = vcvt.s32.f32 %v427
        %v430 = vcvt.s32.f32 %v428
        %vm431 = vcmask 64512
        %v432 = vsel %vm431, %v395, 0.0
        %433 = vadd.xlane.f32.xlu0 %v432
        %v434 = vpop.xlane.xlu0 %433
        %v435 = vsel %vm431, %v396, 0.0
        %436 = vadd.xlane.f32.xlu0 %v435
        %v437 = vpop.xlane.xlu0 %436
        %v438 = vadd.f32 %v434, 1e-09
        %v439 = vadd.f32 %v437, 1e-09
        %v440 = vrcp.pop %v438
        %v441 = vmul.f32 %v429, %v440
        %v442 = vrcp.pop %v439
        %v443 = vmul.f32 %v430, %v442
        %v444 = vld [vmem:[%s4] sm:$0xff]
        %v445 = vld [vmem:[%s4 + $0x8] sm:$0xff]
        %v446 = vld [vmem:[%s4 + $0x10] sm:$0xff]
        %v447 = vld [vmem:[%s4 + $0x18] sm:$0xff]
        %v448 = vld [vmem:[%s4 + $0x20] sm:$0xff]
        %v449 = vld [vmem:[%s5] sm:$0xff]
        %v451 = vsel %vm431, %v423, 0
        %v454 = vsel %vm431, %v424, 0
        %456 = vmatprep.subr.mxu0 0.0
        %457 = vmatpush1.msra.mxu0 %v449
        %458 = vmatprep.subr.mxu0 0.0
        %459 = vmatpush1.msra.mxu0 0.0
        %460 = vmatprep.subr.mxu0 0.0
        %461 = vmatpush1.msra.mxu0 0.0
        %462 = vmatprep.subr.mxu0 0.0
        %463 = vmatpush1.msra.mxu0 0.0
        %464 = vmatprep.subr.mxu0 0.0
        %465 = vmatpush1.msra.mxu0 0.0
        %466 = vmatprep.subr.mxu0 0.0
        %467 = vmatpush1.msra.mxu0 0.0
        %468 = vmatprep.subr.mxu0 0.0
        %469 = vmatpush1.msra.mxu0 0.0
        %470 = vmatprep.subr.mxu0 0.0
        %471 = vmatpush1.msra.mxu0 0.0
        %472 = vmatprep.subr.mxu0 0.0
        %473 = vmatpush1.msra.mxu0 0.0
        %474 = vmatprep.subr.mxu0 0.0
        %475 = vmatpush1.msra.mxu0 0.0
        %476 = vmatprep.subr.mxu0 0.0
        %477 = vmatpush1.msra.mxu0 0.0
        %478 = vmatprep.subr.mxu0 0.0
        %479 = vmatpush1.msra.mxu0 0.0
        %480 = vmatprep.subr.mxu0 0.0
        %481 = vmatpush1.msra.mxu0 0.0
        %482 = vmatprep.subr.mxu0 0.0
        %483 = vmatpush1.msra.mxu0 0.0
        %484 = vmatprep.subr.mxu0 0.0
        %485 = vmatpush1.msra.mxu0 0.0
        %486 = vmatprep.subr.mxu0 0.0
        %487 = vmatpush1.msra.mxu0 0.0
        %488 = vmatprep.subr.mxu0 0.0
        %489 = vmatpush1.msra.mxu0 0.0
        %490 = vmatprep.subr.mxu0 0.0
        %491 = vmatpush1.msra.mxu0 0.0
        %492 = vmatprep.subr.mxu0 0.0
        %493 = vmatpush1.msra.mxu0 0.0
        %494 = vmatprep.subr.mxu0 0.0
        %495 = vmatpush1.msra.mxu0 0.0
        %496 = vmatprep.subr.mxu0 0.0
        %497 = vmatpush1.msra.mxu0 0.0
        %498 = vmatprep.subr.mxu0 0.0
        %499 = vmatpush1.msra.mxu0 0.0
        %500 = vmatprep.subr.mxu0 0.0
        %501 = vmatpush1.msra.mxu0 0.0
        %502 = vmatprep.subr.mxu0 0.0
        %503 = vmatpush1.msra.mxu0 0.0
        %504 = vmatprep.subr.mxu0 0.0
        %505 = vmatpush1.msra.mxu0 0.0
        %506 = vmatprep.subr.mxu0 0.0
        %507 = vmatpush1.msra.mxu0 0.0
        %508 = vmatprep.subr.mxu0 0.0
        %509 = vmatpush1.msra.mxu0 0.0
        %510 = vmatprep.subr.mxu0 0.0
        %511 = vmatpush1.msra.mxu0 0.0
        %512 = vmatprep.subr.mxu0 0.0
        %513 = vmatpush1.msra.mxu0 0.0
        %514 = vmatprep.subr.mxu0 0.0
        %515 = vmatpush1.msra.mxu0 0.0
        %516 = vmatprep.subr.mxu0 0.0
        %517 = vmatpush1.msra.mxu0 0.0
        %518 = vmatprep.subr.mxu0 0.0
        %519 = vmatpush1.msra.mxu0 0.0
        %520 = vmatprep.mubr.f32.mxu0 0.0
        %521 = vmatmul.mubr.f32.gmra.mrb[0].mxu0 %v451
        %v522 = vpop.f32.mrb[0].mxu0
        %v523 = vadd.f32 0.0, %v522
        %v524 = vpop.f32.mrb[0].mxu0
        %525 = vmatprep.mubr.f32.mxu0 0.0
        %526 = vmatmul.mubr.f32.gmra.mrb[0].mxu0 %v454
        %v527 = vpop.f32.mrb[0].mxu0
        %v528 = vadd.f32 0.0, %v527
        %v529 = vpop.f32.mrb[0].mxu0
        %530 = vdwg.mxu0
        %vm531 = vcmask 326656
        %v533 = vsel %vm531, %v411, 0
        %v536 = vsel %vm531, %v412, 0
        %538 = vmatprep.subr.mxu0 0.0
        %539 = vmatpush1.msra.mxu0 %v444
        %540 = vmatprep.subr.mxu0 0.0
        %541 = vmatpush1.msra.mxu0 %v445
        %542 = vmatprep.subr.mxu0 0.0
        %543 = vmatpush1.msra.mxu0 %v446
        %544 = vmatprep.subr.mxu0 0.0
        %545 = vmatpush1.msra.mxu0 %v447
        %546 = vmatprep.subr.mxu0 0.0
        %547 = vmatpush1.msra.mxu0 %v448
        %548 = vmatprep.subr.mxu0 0.0
        %549 = vmatpush1.msra.mxu0 0.0
        %550 = vmatprep.subr.mxu0 0.0
        %551 = vmatpush1.msra.mxu0 0.0
        %552 = vmatprep.subr.mxu0 0.0
        %553 = vmatpush1.msra.mxu0 0.0
        %554 = vmatprep.subr.mxu0 0.0
        %555 = vmatpush1.msra.mxu0 0.0
        %556 = vmatprep.subr.mxu0 0.0
        %557 = vmatpush1.msra.mxu0 0.0
        %558 = vmatprep.subr.mxu0 0.0
        %559 = vmatpush1.msra.mxu0 0.0
        %560 = vmatprep.subr.mxu0 0.0
        %561 = vmatpush1.msra.mxu0 0.0
        %562 = vmatprep.subr.mxu0 0.0
        %563 = vmatpush1.msra.mxu0 0.0
        %564 = vmatprep.subr.mxu0 0.0
        %565 = vmatpush1.msra.mxu0 0.0
        %566 = vmatprep.subr.mxu0 0.0
        %567 = vmatpush1.msra.mxu0 0.0
        %568 = vmatprep.subr.mxu0 0.0
        %569 = vmatpush1.msra.mxu0 0.0
        %570 = vmatprep.subr.mxu0 0.0
        %571 = vmatpush1.msra.mxu0 0.0
        %572 = vmatprep.subr.mxu0 0.0
        %573 = vmatpush1.msra.mxu0 0.0
        %574 = vmatprep.subr.mxu0 0.0
        %575 = vmatpush1.msra.mxu0 0.0
        %576 = vmatprep.subr.mxu0 0.0
        %577 = vmatpush1.msra.mxu0 0.0
        %578 = vmatprep.subr.mxu0 0.0
        %579 = vmatpush1.msra.mxu0 0.0
        %580 = vmatprep.subr.mxu0 0.0
        %581 = vmatpush1.msra.mxu0 0.0
        %582 = vmatprep.subr.mxu0 0.0
        %583 = vmatpush1.msra.mxu0 0.0
        %584 = vmatprep.subr.mxu0 0.0
        %585 = vmatpush1.msra.mxu0 0.0
        %586 = vmatprep.subr.mxu0 0.0
        %587 = vmatpush1.msra.mxu0 0.0
        %588 = vmatprep.subr.mxu0 0.0
        %589 = vmatpush1.msra.mxu0 0.0
        %590 = vmatprep.subr.mxu0 0.0
        %591 = vmatpush1.msra.mxu0 0.0
        %592 = vmatprep.subr.mxu0 0.0
        %593 = vmatpush1.msra.mxu0 0.0
        %594 = vmatprep.subr.mxu0 0.0
        %595 = vmatpush1.msra.mxu0 0.0
        %596 = vmatprep.subr.mxu0 0.0
        %597 = vmatpush1.msra.mxu0 0.0
        %598 = vmatprep.subr.mxu0 0.0
        %599 = vmatpush1.msra.mxu0 0.0
        %600 = vmatprep.subr.mxu0 0.0
        %601 = vmatpush1.msra.mxu0 0.0
        %602 = vmatprep.mubr.f32.mxu0 0.0
        %603 = vmatmul.mubr.f32.gmra.mrb[0].mxu0 %v533
        %v604 = vpop.f32.mrb[0].mxu0
        %v605 = vadd.f32 %v523, %v604
        %v606 = vpop.f32.mrb[0].mxu0
        %607 = vmatprep.mubr.f32.mxu0 0.0
        %608 = vmatmul.mubr.f32.gmra.mrb[0].mxu0 %v536
        %v609 = vpop.f32.mrb[0].mxu0
        %v610 = vadd.f32 %v528, %v609
        %v611 = vpop.f32.mrb[0].mxu0
        %612 = vdwg.mxu0
        %v613 = vld [vmem:[%s6] sm:$0xff]
        %v615 = vsel %vm431, %v395, 0
        %v618 = vsel %vm431, %v396, 0
        %620 = vmatprep.subr.mxu0 0.0
        %621 = vmatpush1.msra.mxu0 %v613
        %622 = vmatprep.subr.mxu0 0.0
        %623 = vmatpush1.msra.mxu0 0.0
        %624 = vmatprep.subr.mxu0 0.0
        %625 = vmatpush1.msra.mxu0 0.0
        %626 = vmatprep.subr.mxu0 0.0
        %627 = vmatpush1.msra.mxu0 0.0
        %628 = vmatprep.subr.mxu0 0.0
        %629 = vmatpush1.msra.mxu0 0.0
        %630 = vmatprep.subr.mxu0 0.0
        %631 = vmatpush1.msra.mxu0 0.0
        %632 = vmatprep.subr.mxu0 0.0
        %633 = vmatpush1.msra.mxu0 0.0
        %634 = vmatprep.subr.mxu0 0.0
        %635 = vmatpush1.msra.mxu0 0.0
        %636 = vmatprep.subr.mxu0 0.0
        %637 = vmatpush1.msra.mxu0 0.0
        %638 = vmatprep.subr.mxu0 0.0
        %639 = vmatpush1.msra.mxu0 0.0
        %640 = vmatprep.subr.mxu0 0.0
        %641 = vmatpush1.msra.mxu0 0.0
        %642 = vmatprep.subr.mxu0 0.0
        %643 = vmatpush1.msra.mxu0 0.0
        %644 = vmatprep.subr.mxu0 0.0
        %645 = vmatpush1.msra.mxu0 0.0
        %646 = vmatprep.subr.mxu0 0.0
        %647 = vmatpush1.msra.mxu0 0.0
        %648 = vmatprep.subr.mxu0 0.0
        %649 = vmatpush1.msra.mxu0 0.0
        %650 = vmatprep.subr.mxu0 0.0
        %651 = vmatpush1.msra.mxu0 0.0
        %652 = vmatprep.subr.mxu0 0.0
        %653 = vmatpush1.msra.mxu0 0.0
        %654 = vmatprep.subr.mxu0 0.0
        %655 = vmatpush1.msra.mxu0 0.0
        %656 = vmatprep.subr.mxu0 0.0
        %657 = vmatpush1.msra.mxu0 0.0
        %658 = vmatprep.subr.mxu0 0.0
        %659 = vmatpush1.msra.mxu0 0.0
        %660 = vmatprep.subr.mxu0 0.0
        %661 = vmatpush1.msra.mxu0 0.0
        %662 = vmatprep.subr.mxu0 0.0
        %663 = vmatpush1.msra.mxu0 0.0
        %664 = vmatprep.subr.mxu0 0.0
        %665 = vmatpush1.msra.mxu0 0.0
        %666 = vmatprep.subr.mxu0 0.0
        %667 = vmatpush1.msra.mxu0 0.0
        %668 = vmatprep.subr.mxu0 0.0
        %669 = vmatpush1.msra.mxu0 0.0
        %670 = vmatprep.subr.mxu0 0.0
        %671 = vmatpush1.msra.mxu0 0.0
        %672 = vmatprep.subr.mxu0 0.0
        %673 = vmatpush1.msra.mxu0 0.0
        %674 = vmatprep.subr.mxu0 0.0
        %675 = vmatpush1.msra.mxu0 0.0
        %676 = vmatprep.subr.mxu0 0.0
        %677 = vmatpush1.msra.mxu0 0.0
        %678 = vmatprep.subr.mxu0 0.0
        %679 = vmatpush1.msra.mxu0 0.0
        %680 = vmatprep.subr.mxu0 0.0
        %681 = vmatpush1.msra.mxu0 0.0
        %682 = vmatprep.subr.mxu0 0.0
        %683 = vmatpush1.msra.mxu0 0.0
        %684 = vmatprep.mubr.f32.mxu0 0.0
        %685 = vmatmul.mubr.f32.gmra.mrb[0].mxu0 %v615
        %v686 = vpop.f32.mrb[0].mxu0
        %v687 = vadd.f32 0.0, %v686
        %v688 = vpop.f32.mrb[0].mxu0
        %689 = vmatprep.mubr.f32.mxu0 0.0
        %690 = vmatmul.mubr.f32.gmra.mrb[0].mxu0 %v618
        %v691 = vpop.f32.mrb[0].mxu0
        %v692 = vadd.f32 0.0, %v691
        %v693 = vpop.f32.mrb[0].mxu0
        %694 = vdwg.mxu0
        %696 = vset.pattern.permute.xlu0 0
        %697 = vperm.xlu0 %696, %v441
        %v698 = vpop.permute.xlu0 %697
        %701 = vset.pattern.permute.xlu0 0
        %702 = vperm.xlu0 %701, %v443
        %v703 = vpop.permute.xlu0 %702
        %v705 = vmul.f32 %v698, %v687
        %v706 = vmul.f32 %v703, %v692
        %v707 = vadd.f32 %v605, %v705
        %v708 = vadd.f32 %v610, %v706
        %v709 = vld [vmem:[%s7] sm:$0xff]
        %v710 = vld [vmem:[%s7 + $0x8] sm:$0xff]
        %v711 = vld [vmem:[%s7 + $0x10] sm:$0xff]
        %v712 = vld [vmem:[%s7 + $0x18] sm:$0xff]
        %v713 = vld [vmem:[%s7 + $0x20] sm:$0xff]
        %v714 = vld [vmem:[%s7 + $0x28] sm:$0xff]
        %v715 = vld [vmem:[%s7 + $0x30] sm:$0xff]
        %v716 = vld [vmem:[%s7 + $0x38] sm:$0xff]
        %v717 = vld [vmem:[%s7 + $0x40] sm:$0xff]
        %v718 = vld [vmem:[%s7 + $0x48] sm:$0xff]
        %v719 = vld [vmem:[%s7 + $0x50] sm:$0xff]
        %v720 = vld [vmem:[%s7 + $0x58] sm:$0xff]
        %v721 = vld [vmem:[%s7 + $0x60] sm:$0xff]
        %v722 = vld [vmem:[%s7 + $0x68] sm:$0xff]
        %v723 = vld [vmem:[%s7 + $0x70] sm:$0xff]
        %v724 = vld [vmem:[%s7 + $0x78] sm:$0xff]
        %v725 = vld [vmem:[%s8] sm:$0x1]
        %v727 = vlaneseq
        %v728 = vshrl.u32 %v727, 7
        %v729 = vsub.s32 0, %v728
        %v730 = vrot.slane %v725, %v729
        %733 = vset.pattern.permute.xlu0 0
        %734 = vperm.xlu0 %733, %v429
        %v735 = vpop.permute.xlu0 %734
        %738 = vset.pattern.permute.xlu0 0
        %739 = vperm.xlu0 %738, %v430
        %v740 = vpop.permute.xlu0 %739
        %vm742 = vcmask 130048
        %v744 = vsel %vm742, %v397, 0
        %v747 = vsel %vm742, %v398, 0
        %749 = vmatprep.subr.mxu0 0.0
        %750 = vmatpush1.msra.mxu0 %v707
        %751 = vmatprep.subr.mxu0 0.0
        %752 = vmatpush1.msra.mxu0 %v708
        %753 = vmatprep.subr.mxu0 0.0
        %754 = vmatpush1.msra.mxu0 0.0
        %755 = vmatprep.subr.mxu0 0.0
        %756 = vmatpush1.msra.mxu0 0.0
        %757 = vmatprep.subr.mxu0 0.0
        %758 = vmatpush1.msra.mxu0 0.0
        %759 = vmatprep.subr.mxu0 0.0
        %760 = vmatpush1.msra.mxu0 0.0
        %761 = vmatprep.subr.mxu0 0.0
        %762 = vmatpush1.msra.mxu0 0.0
        %763 = vmatprep.subr.mxu0 0.0
        %764 = vmatpush1.msra.mxu0 0.0
        %765 = vmatprep.subr.mxu0 0.0
        %766 = vmatpush1.msra.mxu0 0.0
        %767 = vmatprep.subr.mxu0 0.0
        %768 = vmatpush1.msra.mxu0 0.0
        %769 = vmatprep.subr.mxu0 0.0
        %770 = vmatpush1.msra.mxu0 0.0
        %771 = vmatprep.subr.mxu0 0.0
        %772 = vmatpush1.msra.mxu0 0.0
        %773 = vmatprep.subr.mxu0 0.0
        %774 = vmatpush1.msra.mxu0 0.0
        %775 = vmatprep.subr.mxu0 0.0
        %776 = vmatpush1.msra.mxu0 0.0
        %777 = vmatprep.subr.mxu0 0.0
        %778 = vmatpush1.msra.mxu0 0.0
        %779 = vmatprep.subr.mxu0 0.0
        %780 = vmatpush1.msra.mxu0 0.0
        %781 = vmatprep.subr.mxu0 0.0
        %782 = vmatpush1.msra.mxu0 0.0
        %783 = vmatprep.subr.mxu0 0.0
        %784 = vmatpush1.msra.mxu0 0.0
        %785 = vmatprep.subr.mxu0 0.0
        %786 = vmatpush1.msra.mxu0 0.0
        %787 = vmatprep.subr.mxu0 0.0
        %788 = vmatpush1.msra.mxu0 0.0
        %789 = vmatprep.subr.mxu0 0.0
        %790 = vmatpush1.msra.mxu0 0.0
        %791 = vmatprep.subr.mxu0 0.0
        %792 = vmatpush1.msra.mxu0 0.0
        %793 = vmatprep.subr.mxu0 0.0
        %794 = vmatpush1.msra.mxu0 0.0
        %795 = vmatprep.subr.mxu0 0.0
        %796 = vmatpush1.msra.mxu0 0.0
        %797 = vmatprep.subr.mxu0 0.0
        %798 = vmatpush1.msra.mxu0 0.0
        %799 = vmatprep.subr.mxu0 0.0
        %800 = vmatpush1.msra.mxu0 0.0
        %801 = vmatprep.subr.mxu0 0.0
        %802 = vmatpush1.msra.mxu0 0.0
        %803 = vmatprep.subr.mxu0 0.0
        %804 = vmatpush1.msra.mxu0 0.0
        %805 = vmatprep.subr.mxu0 0.0
        %806 = vmatpush1.msra.mxu0 0.0
        %807 = vmatprep.subr.mxu0 0.0
        %808 = vmatpush1.msra.mxu0 0.0
        %809 = vmatprep.subr.mxu0 0.0
        %810 = vmatpush1.msra.mxu0 0.0
        %811 = vmatprep.subr.mxu0 0.0
        %812 = vmatpush1.msra.mxu0 0.0
        %813 = vmatprep.mubr.f32.mxu0 0.0
        %814 = vmatmul.mubr.f32.gmra.mrb[0].mxu0 %v744
        %v815 = vpop.f32.mrb[0].mxu0
        %v816 = vadd.f32 0.0, %v815
        %v817 = vpop.f32.mrb[0].mxu0
        %818 = vmatprep.mubr.f32.mxu0 0.0
        %819 = vmatmul.mubr.f32.gmra.mrb[0].mxu0 %v747
        %v820 = vpop.f32.mrb[0].mxu0
        %v821 = vadd.f32 0.0, %v820
        %v822 = vpop.f32.mrb[0].mxu0
        %823 = vdwg.mxu0
        %824 = vmatprep.subr.mxu0 0.0
        %825 = vmatpush1.msra.mxu0 %v709
        %826 = vmatprep.subr.mxu0 0.0
        %827 = vmatpush1.msra.mxu0 %v710
        %828 = vmatprep.subr.mxu0 0.0
        %829 = vmatpush1.msra.mxu0 %v711
        %830 = vmatprep.subr.mxu0 0.0
        %831 = vmatpush1.msra.mxu0 %v712
        %832 = vmatprep.subr.mxu0 0.0
        %833 = vmatpush1.msra.mxu0 %v713
        %834 = vmatprep.subr.mxu0 0.0
        %835 = vmatpush1.msra.mxu0 %v714
        %836 = vmatprep.subr.mxu0 0.0
        %837 = vmatpush1.msra.mxu0 %v715
        %838 = vmatprep.subr.mxu0 0.0
        %839 = vmatpush1.msra.mxu0 %v716
        %840 = vmatprep.subr.mxu0 0.0
        %841 = vmatpush1.msra.mxu0 %v717
        %842 = vmatprep.subr.mxu0 0.0
        %843 = vmatpush1.msra.mxu0 %v718
        %844 = vmatprep.subr.mxu0 0.0
        %845 = vmatpush1.msra.mxu0 %v719
        %846 = vmatprep.subr.mxu0 0.0
        %847 = vmatpush1.msra.mxu0 %v720
        %848 = vmatprep.subr.mxu0 0.0
        %849 = vmatpush1.msra.mxu0 %v721
        %850 = vmatprep.subr.mxu0 0.0
        %851 = vmatpush1.msra.mxu0 %v722
        %852 = vmatprep.subr.mxu0 0.0
        %853 = vmatpush1.msra.mxu0 %v723
        %854 = vmatprep.subr.mxu0 0.0
        %855 = vmatpush1.msra.mxu0 %v724
        %856 = vmatprep.subr.mxu0 0.0
        %857 = vmatpush1.msra.mxu0 0.0
        %858 = vmatprep.subr.mxu0 0.0
        %859 = vmatpush1.msra.mxu0 0.0
        %860 = vmatprep.subr.mxu0 0.0
        %861 = vmatpush1.msra.mxu0 0.0
        %862 = vmatprep.subr.mxu0 0.0
        %863 = vmatpush1.msra.mxu0 0.0
        %864 = vmatprep.subr.mxu0 0.0
        %865 = vmatpush1.msra.mxu0 0.0
        %866 = vmatprep.subr.mxu0 0.0
        %867 = vmatpush1.msra.mxu0 0.0
        %868 = vmatprep.subr.mxu0 0.0
        %869 = vmatpush1.msra.mxu0 0.0
        %870 = vmatprep.subr.mxu0 0.0
        %871 = vmatpush1.msra.mxu0 0.0
        %872 = vmatprep.subr.mxu0 0.0
        %873 = vmatpush1.msra.mxu0 0.0
        %874 = vmatprep.subr.mxu0 0.0
        %875 = vmatpush1.msra.mxu0 0.0
        %876 = vmatprep.subr.mxu0 0.0
        %877 = vmatpush1.msra.mxu0 0.0
        %878 = vmatprep.subr.mxu0 0.0
        %879 = vmatpush1.msra.mxu0 0.0
        %880 = vmatprep.subr.mxu0 0.0
        %881 = vmatpush1.msra.mxu0 0.0
        %882 = vmatprep.subr.mxu0 0.0
        %883 = vmatpush1.msra.mxu0 0.0
        %884 = vmatprep.subr.mxu0 0.0
        %885 = vmatpush1.msra.mxu0 0.0
        %886 = vmatprep.subr.mxu0 0.0
        %887 = vmatpush1.msra.mxu0 0.0
        %888 = vmatprep.mubr.f32.mxu0 0.0
        %889 = vmatmul.mubr.f32.gmra.mrb[0].mxu0 %v816
        %v890 = vpop.f32.mrb[0].mxu0
        %v891 = vadd.f32 %v730, %v890
        %v892 = vpop.f32.mrb[0].mxu0
        %893 = vmatprep.mubr.f32.mxu0 0.0
        %894 = vmatmul.mubr.f32.gmra.mrb[0].mxu0 %v821
        %v895 = vpop.f32.mrb[0].mxu0
        %v896 = vadd.f32 %v730, %v895
        %v897 = vpop.f32.mrb[0].mxu0
        %898 = vdwg.mxu0
        %v899 = vmax.f32 %v891, 0.0
        %v900 = vmax.f32 %v896, 0.0
        %v901 = vmul.f32 %v899, %v735
        %v902 = vmul.f32 %v900, %v740
        %903 = vmatprep.subr.mxu0 0.0
        %904 = vmatpush1.msra.mxu0 %v901
        %905 = vmatprep.subr.mxu0 0.0
        %906 = vmatpush1.msra.mxu0 %v902
        %907 = vmatprep.subr.mxu0 0.0
        %908 = vmatpush1.msra.mxu0 0.0
        %909 = vmatprep.subr.mxu0 0.0
        %910 = vmatpush1.msra.mxu0 0.0
        %911 = vmatprep.subr.mxu0 0.0
        %912 = vmatpush1.msra.mxu0 0.0
        %913 = vmatprep.subr.mxu0 0.0
        %914 = vmatpush1.msra.mxu0 0.0
        %915 = vmatprep.subr.mxu0 0.0
        %916 = vmatpush1.msra.mxu0 0.0
        %917 = vmatprep.subr.mxu0 0.0
        %918 = vmatpush1.msra.mxu0 0.0
        %919 = vmatprep.subr.mxu0 0.0
        %920 = vmatpush1.msra.mxu0 0.0
        %921 = vmatprep.subr.mxu0 0.0
        %922 = vmatpush1.msra.mxu0 0.0
        %923 = vmatprep.subr.mxu0 0.0
        %924 = vmatpush1.msra.mxu0 0.0
        %925 = vmatprep.subr.mxu0 0.0
        %926 = vmatpush1.msra.mxu0 0.0
        %927 = vmatprep.subr.mxu0 0.0
        %928 = vmatpush1.msra.mxu0 0.0
        %929 = vmatprep.subr.mxu0 0.0
        %930 = vmatpush1.msra.mxu0 0.0
        %931 = vmatprep.subr.mxu0 0.0
        %932 = vmatpush1.msra.mxu0 0.0
        %933 = vmatprep.subr.mxu0 0.0
        %934 = vmatpush1.msra.mxu0 0.0
        %935 = vmatprep.subr.mxu0 0.0
        %936 = vmatpush1.msra.mxu0 0.0
        %937 = vmatprep.subr.mxu0 0.0
        %938 = vmatpush1.msra.mxu0 0.0
        %939 = vmatprep.subr.mxu0 0.0
        %940 = vmatpush1.msra.mxu0 0.0
        %941 = vmatprep.subr.mxu0 0.0
        %942 = vmatpush1.msra.mxu0 0.0
        %943 = vmatprep.subr.mxu0 0.0
        %944 = vmatpush1.msra.mxu0 0.0
        %945 = vmatprep.subr.mxu0 0.0
        %946 = vmatpush1.msra.mxu0 0.0
        %947 = vmatprep.subr.mxu0 0.0
        %948 = vmatpush1.msra.mxu0 0.0
        %949 = vmatprep.subr.mxu0 0.0
        %950 = vmatpush1.msra.mxu0 0.0
        %951 = vmatprep.subr.mxu0 0.0
        %952 = vmatpush1.msra.mxu0 0.0
        %953 = vmatprep.subr.mxu0 0.0
        %954 = vmatpush1.msra.mxu0 0.0
        %955 = vmatprep.subr.mxu0 0.0
        %956 = vmatpush1.msra.mxu0 0.0
        %957 = vmatprep.subr.mxu0 0.0
        %958 = vmatpush1.msra.mxu0 0.0
        %959 = vmatprep.subr.mxu0 0.0
        %960 = vmatpush1.msra.mxu0 0.0
        %961 = vmatprep.subr.mxu0 0.0
        %962 = vmatpush1.msra.mxu0 0.0
        %963 = vmatprep.subr.mxu0 0.0
        %964 = vmatpush1.msra.mxu0 0.0
        %965 = vmatprep.subr.mxu0 0.0
        %966 = vmatpush1.msra.mxu0 0.0
        %967 = vmatprep.mubr.f32.mxu0 0.0
        %968 = vmatmul.mubr.f32.gmra.mrb[0].mxu0 %v744
        %v969 = vpop.f32.mrb[0].mxu0
        %v970 = vadd.f32 0.0, %v969
        %v971 = vpop.f32.mrb[0].mxu0
        %972 = vmatprep.mubr.f32.mxu0 0.0
        %973 = vmatmul.mubr.f32.gmra.mrb[0].mxu0 %v747
        %v974 = vpop.f32.mrb[0].mxu0
        %v975 = vadd.f32 0.0, %v974
        %v976 = vpop.f32.mrb[0].mxu0
        %977 = vdwg.mxu0
        %978 = vmatprep.subr.mxu0 0.0
        %979 = vmatpush1.msra.mxu0 %v709
        %980 = vmatprep.subr.mxu0 0.0
        %981 = vmatpush1.msra.mxu0 %v710
        %982 = vmatprep.subr.mxu0 0.0
        %983 = vmatpush1.msra.mxu0 %v711
        %984 = vmatprep.subr.mxu0 0.0
        %985 = vmatpush1.msra.mxu0 %v712
        %986 = vmatprep.subr.mxu0 0.0
        %987 = vmatpush1.msra.mxu0 %v713
        %988 = vmatprep.subr.mxu0 0.0
        %989 = vmatpush1.msra.mxu0 %v714
        %990 = vmatprep.subr.mxu0 0.0
        %991 = vmatpush1.msra.mxu0 %v715
        %992 = vmatprep.subr.mxu0 0.0
        %993 = vmatpush1.msra.mxu0 %v716
        %994 = vmatprep.subr.mxu0 0.0
        %995 = vmatpush1.msra.mxu0 %v717
        %996 = vmatprep.subr.mxu0 0.0
        %997 = vmatpush1.msra.mxu0 %v718
        %998 = vmatprep.subr.mxu0 0.0
        %999 = vmatpush1.msra.mxu0 %v719
        %1000 = vmatprep.subr.mxu0 0.0
        %1001 = vmatpush1.msra.mxu0 %v720
        %1002 = vmatprep.subr.mxu0 0.0
        %1003 = vmatpush1.msra.mxu0 %v721
        %1004 = vmatprep.subr.mxu0 0.0
        %1005 = vmatpush1.msra.mxu0 %v722
        %1006 = vmatprep.subr.mxu0 0.0
        %1007 = vmatpush1.msra.mxu0 %v723
        %1008 = vmatprep.subr.mxu0 0.0
        %1009 = vmatpush1.msra.mxu0 %v724
        %1010 = vmatprep.subr.mxu0 0.0
        %1011 = vmatpush1.msra.mxu0 0.0
        %1012 = vmatprep.subr.mxu0 0.0
        %1013 = vmatpush1.msra.mxu0 0.0
        %1014 = vmatprep.subr.mxu0 0.0
        %1015 = vmatpush1.msra.mxu0 0.0
        %1016 = vmatprep.subr.mxu0 0.0
        %1017 = vmatpush1.msra.mxu0 0.0
        %1018 = vmatprep.subr.mxu0 0.0
        %1019 = vmatpush1.msra.mxu0 0.0
        %1020 = vmatprep.subr.mxu0 0.0
        %1021 = vmatpush1.msra.mxu0 0.0
        %1022 = vmatprep.subr.mxu0 0.0
        %1023 = vmatpush1.msra.mxu0 0.0
        %1024 = vmatprep.subr.mxu0 0.0
        %1025 = vmatpush1.msra.mxu0 0.0
        %1026 = vmatprep.subr.mxu0 0.0
        %1027 = vmatpush1.msra.mxu0 0.0
        %1028 = vmatprep.subr.mxu0 0.0
        %1029 = vmatpush1.msra.mxu0 0.0
        %1030 = vmatprep.subr.mxu0 0.0
        %1031 = vmatpush1.msra.mxu0 0.0
        %1032 = vmatprep.subr.mxu0 0.0
        %1033 = vmatpush1.msra.mxu0 0.0
        %1034 = vmatprep.subr.mxu0 0.0
        %1035 = vmatpush1.msra.mxu0 0.0
        %1036 = vmatprep.subr.mxu0 0.0
        %1037 = vmatpush1.msra.mxu0 0.0
        %1038 = vmatprep.subr.mxu0 0.0
        %1039 = vmatpush1.msra.mxu0 0.0
        %1040 = vmatprep.subr.mxu0 0.0
        %1041 = vmatpush1.msra.mxu0 0.0
        %1042 = vmatprep.mubr.f32.mxu0 0.0
        %1043 = vmatmul.mubr.f32.gmra.mrb[0].mxu0 %v970
        %v1044 = vpop.f32.mrb[0].mxu0
        %v1045 = vadd.f32 %v730, %v1044
        %v1046 = vpop.f32.mrb[0].mxu0
        %1047 = vmatprep.mubr.f32.mxu0 0.0
        %1048 = vmatmul.mubr.f32.gmra.mrb[0].mxu0 %v975
        %v1049 = vpop.f32.mrb[0].mxu0
        %v1050 = vadd.f32 %v730, %v1049
        %v1051 = vpop.f32.mrb[0].mxu0
        %1052 = vdwg.mxu0
        %v1053 = vmax.f32 %v1045, 0.0
        %v1054 = vmax.f32 %v1050, 0.0
        %v1055 = vmul.f32 %v1053, %v735
        %v1056 = vmul.f32 %v1054, %v740
        %1057 = vst [vmem:[%s370] sm:$0xff] %v1055
        %1058 = vst [vmem:[%s370 + $0x8] sm:$0xff] %v1056
        %s1059 = sand.u32 %s240, 1
        %s1060 = scalar_lea.sflag [#allocation3], %s1059
        %s1061 = sand.u32 %s240, 1
        %s1062 = smul.addr %s1061, 16
        %s1063 = scalar_lea.vmem [#allocation2], %s1062
        // Predicated region
        $region57: #{vlgraph_forward.1} parent=55 // pred_check
          %p1064 = pneg %p250
        $region58: #{vlgraph_forward.1} parent=55 // pred_check_branch
          %1066 = sbr.rel (%p1064) target = $region60
        $region59: #{vlgraph_forward.1} parent=55 // pred_region
          %s1068 = ssub.s32 256, 256
          %1069 = vsyncadd %s1060, %s1068
          %s1070 = smul.addr %s23, 2
          %s1071 = smul.addr %s1070, 128
          %s1072 = scalar_lea.hbm %s9, %s1071
          %s1073 = sshll.u32 %s1063, 4
          %s1074 = int_to_ptr.vmem [resolvable:$true] %s1073
          %1079 = dma.vmem_to_hbm [thread:$0]  %s1074, 256, %s1072, %s1060, 128, 128, 8
        $region60: #{vlgraph_forward.1} parent=55 // pred_fallthru
          _
      $region56: #{vlgraph_forward.1} parent=5 // pred_fallthru
        _
      %p1080 = scmp.le.s32.totalorder 2, %s18
      // Predicated region
      $region61: #{vlgraph_forward.1} parent=5 // pred_check
        %p1081 = pneg %p1080
      $region62: #{vlgraph_forward.1} parent=5 // pred_check_branch
        %1083 = sbr.rel (%p1081) target = $region64
      $region63: #{vlgraph_forward.1} parent=5 // pred_region
        %s1084 = ssub.s32 %s18, 2
        // Predicated region
        $region65: #{vlgraph_forward.1} parent=63 // pred_check
          %p1085 = pneg %p256
        $region66: #{vlgraph_forward.1} parent=63 // pred_check_branch
          %1087 = sbr.rel (%p1085) target = $region68
        $region67: #{vlgraph_forward.1} parent=63 // pred_region
          %s1088 = sand.u32 %s241, 1
          %s1089 = scalar_lea.sflag [#allocation3], %s1088
          %s1090 = sand.u32 %s241, 1
          %s1091 = smul.addr %s1090, 16
          %s1092 = scalar_lea.vmem [#allocation2], %s1091
          %1093 = dma.done %s1089, 256
        $region68: #{vlgraph_forward.1} parent=63 // pred_fallthru
          _
      $region64: #{vlgraph_forward.1} parent=5 // pred_fallthru
        _
    $region6: #{vlgraph_forward.1} parent=1 // loop_footer
      %s22 = sadd.s32 1, %s18
    $region7: #{vlgraph_forward.1} parent=1 // loop_footer_branch
      %17 = sbr.rel target = $region3
    $region8: #{vlgraph_forward.1} parent=1 // loop_exit
      _
    %1094 = vsyncpa [#allocation3], 1
    %s1095 = scalar_lea.sflag [#allocation3], 1
    %1096 = vsyncpa %s1095, 1

</llo_original>
